<compile_context>
chip_gen: v7x
topology: tpu7x:2x2x1
jax: 0.10.0
libtpu: 0.0.40
codegen_flags: <defaults>
</compile_context>

<pallas_src>
import functools

import jax
import jax.numpy as jnp
from jax.experimental import pallas as pl
from jax.experimental.pallas import tpu as pltpu


def _round_up(x, m):
    return (x + m - 1) // m * m


def _pad_last(x, mult):
    """Zero-pad the last dim up to a multiple of `mult` (no-op if already aligned)."""
    pad = _round_up(x.shape[-1], mult) - x.shape[-1]
    if pad == 0:
        return x
    cfg = [(0, 0)] * (x.ndim - 1) + [(0, pad)]
    return jnp.pad(x, cfg)


def _inbatch_hard_loss_kernel(
    s_ref, vt_ref, vh_ref, ve_ref, vf_ref, prob_ref, fprob_ref,    # inputs
    loss_ref, pscore_ref,                                          # outputs
    vht_ref, dma_sem, acc_log_ref, acc_diag_ref, m_ref, c_ref,     # scratch
    *, a, a_pad, h, b, n, n_pad, neg, tile_a, num_tiles, tau, scale, plus):
    i = pl.program_id(0)
    f32 = jnp.float32

    # --- first grid step: fuse the torch.cat into VMEM and init accumulators -------
    @pl.when(i == 0)
    def _init():
        cps = (
            pltpu.make_async_copy(vt_ref, vht_ref.at[0:a, :], dma_sem.at[0]),
            pltpu.make_async_copy(vh_ref, vht_ref.at[a:2 * a, :], dma_sem.at[1]),
            pltpu.make_async_copy(ve_ref, vht_ref.at[2 * a:2 * a + h, :], dma_sem.at[2]),
        )
        for cp in cps:          # overlapped HBM -> VMEM copies, issued once
            cp.start()
        if n_pad > n:
            vht_ref[n:n_pad, :] = jnp.zeros((n_pad - n, b), vht_ref.dtype)
        acc_log_ref[...] = jnp.zeros_like(acc_log_ref)
        acc_diag_ref[...] = jnp.zeros_like(acc_diag_ref)
        m_ref[...] = jnp.full_like(m_ref, -jnp.inf)
        c_ref[...] = jnp.zeros_like(c_ref)
        for cp in cps:
            cp.wait()

    # --- main MXU matmul: (T, B) x (N_pad, B)^T -> (T, N_pad) f32 -------------------
    p_raw = jax.lax.dot_general(
        s_ref[...], vht_ref[...],
        (((1,), (1,)), ((), ())),
        preferred_element_type=jnp.float32)

    # subtract the "eye" on the global diagonal (fill_diagonal_(1) subtraction)
    row_ids = i * tile_a + jax.lax.broadcasted_iota(jnp.int32, (tile_a, n_pad), 0)
    col_ids = jax.lax.broadcasted_iota(jnp.int32, (tile_a, n_pad), 1)
    diag_mask = row_ids == col_ids
    p_score = p_raw - diag_mask.astype(f32)
    p_exp = jnp.exp(p_score)

    # the diagonal can only sit in the first a_pad (lane-aligned) columns
    dm_a = diag_mask[:, :a_pad]
    ps_a = p_score[:, :a_pad]
    pe_a = p_exp[:, :a_pad]

    prob = prob_ref[...].astype(f32)                    # zero-padded over padded cols
    nu = jnp.sum(jnp.where(dm_a, pe_a, 0.0), axis=1, keepdims=True)          # (T, 1)
    de1_sum = jnp.sum(p_exp * prob, axis=1, keepdims=True) - nu

    # --- f_score: statically unrolled over NEG (live set stays at (T, B)) -----------
    s_f = s_ref[...].astype(f32)
    fprob = fprob_ref[...].astype(f32)
    de2 = jnp.zeros((tile_a, 1), f32)
    for k in range(neg):
        vf_k = vf_ref[:, k * b:(k + 1) * b].astype(f32)
        fs_k = jnp.sum(s_f * vf_k, axis=1, keepdims=True)
        de2 = de2 + jnp.exp(fs_k) * fprob[:, k:k + 1]
    de2_sum = tau * de2

    de = jnp.maximum(de1_sum - de2_sum, 0.0)            # F.threshold(x, 0, 0)
    log_term = jnp.log(nu / (nu + scale * de))          # (T, 1)
    acc_log_ref[...] += jnp.sum(log_term, axis=0, keepdims=True)

    if plus:
        # diagonal of p_score[:, :a] for the CE target term
        diag_vals = jnp.sum(jnp.where(dm_a, ps_a, 0.0), axis=1, keepdims=True)
        acc_diag_ref[...] += jnp.sum(diag_vals, axis=0, keepdims=True)
        # online column-LSE across row tiles, reusing p_exp (only a_pad extra exps)
        m_old = m_ref[...]
        c_old = c_ref[...]
        tile_max = jnp.max(ps_a, axis=0, keepdims=True)               # (1, A_pad)
        m_new = jnp.maximum(m_old, tile_max)
        col_sum_exp = jnp.sum(pe_a, axis=0, keepdims=True)
        c_ref[...] = c_old * jnp.exp(m_old - m_new) + col_sum_exp * jnp.exp(-m_new)
        m_ref[...] = m_new

    # lane-dense (T, A_pad) store of the modified scores (only cols < A are consumed)
    pscore_ref[...] = ps_a

    # --- last grid step: finalize the scalar loss -----------------------------------
    @pl.when(i == num_tiles - 1)
    def _finalize():
        inv_a = 1.0 / a
        total = -acc_log_ref[...] * inv_a                             # (1, 1)
        if plus:
            lse = jnp.log(c_ref[...]) + m_ref[...]                    # (1, A_pad)
            cmask = jax.lax.broadcasted_iota(jnp.int32, (1, a_pad), 1) < a
            lse_sum = jnp.sum(jnp.where(cmask, lse, 0.0), axis=1, keepdims=True)
            total = total + (lse_sum - acc_diag_ref[...]) * inv_a
        loss_ref[...] = total


def inbatch_hard_loss(s, v_h, v_t, v_f, v_e_hard, prob, f_prob,
                      *, false_negative_size=4, tau=0.05, plus=True, tile_a=None):
    a, b = v_h.shape
    h = v_e_hard.shape[0]
    neg = false_negative_size
    n = 2 * a + h
    # bug-compatible with the PyTorch module: num_neg is the *hidden* dim of v_h_t
    scale = float(b) / (1.0 - tau)

    if tile_a is None:
        tile_a = a
        for t in (512, 256, 128, 64, 32, 16, 8):
            if a % t == 0:
                tile_a = t
                break
    assert a % tile_a == 0 and tile_a % 8 == 0, "A must split into 8-aligned row tiles"
    num_tiles = a // tile_a

    # lane padding: hidden dim (no-op when already k*128), prob columns to N_pad
    n_pad = _round_up(n, 128)
    a_pad = _round_up(a, 128)
    s_p = _pad_last(s, 128)
    v_t_p = _pad_last(v_t, 128)
    v_h_p = _pad_last(v_h, 128)
    v_e_p = _pad_last(v_e_hard, 128)
    v_f_p = _pad_last(v_f, 128)
    b_pad = s_p.shape[-1]
    v_f2 = v_f_p.reshape(a, neg * b_pad)     # contiguous reshape, no data movement
    prob_p = _pad_last(prob, 128)            # zero-pad to (A, N_pad)

    kernel = functools.partial(
        _inbatch_hard_loss_kernel,
        a=a, a_pad=a_pad, h=h, b=b_pad, n=n, n_pad=n_pad, neg=neg,
        tile_a=tile_a, num_tiles=num_tiles,
        tau=float(tau), scale=scale, plus=bool(plus))

    t = tile_a
    in_specs = [
        pl.BlockSpec((t, b_pad), lambda i: (i, 0)),            # s row tile
        pl.BlockSpec(memory_space=pl.ANY),                     # v_t (DMA'd once)
        pl.BlockSpec(memory_space=pl.ANY),                     # v_h (DMA'd once)
        pl.BlockSpec(memory_space=pl.ANY),                     # v_e_hard (DMA'd once)
        pl.BlockSpec((t, neg * b_pad), lambda i: (i, 0)),      # v_f row tile
        pl.BlockSpec((t, n_pad), lambda i: (i, 0)),            # prob (padded) row tile
        pl.BlockSpec((t, neg), lambda i: (i, 0)),              # f_prob row tile
    ]
    out_specs = (
        pl.BlockSpec((1, 1), lambda i: (0, 0)),                # loss (finalized last)
        pl.BlockSpec((t, a_pad), lambda i: (i, 0)),            # padded p_score[:, :A]
    )
    scratch_shapes = [
        pltpu.VMEM((n_pad, b_pad), v_h_p.dtype),   # assembled RHS (fused concat)
        pltpu.SemaphoreType.DMA((3,)),             # sems for the 3 one-time copies
        pltpu.VMEM((1, 1), jnp.float32),           # running sum log(nu/(nu+scale*de))
        pltpu.VMEM((1, 1), jnp.float32),           # running sum diag(p_score[:, :a])
        pltpu.VMEM((1, a_pad), jnp.float32),       # running column max
        pltpu.VMEM((1, a_pad), jnp.float32),       # running column sum-exp
    ]

    in_arrays = (s_p, v_t_p, v_h_p, v_e_p, v_f2, prob_p, f_prob)
    flops = 2 * a * n * b + 2 * a * neg * b
    transcendentals = a * (n_pad + neg + 1) + num_tiles * 2 * a_pad + a_pad
    bytes_accessed = sum(int(x.size) * x.dtype.itemsize for x in in_arrays)
    bytes_accessed += a * a_pad * 4 + 4

    loss, p_full = pl.pallas_call(
        kernel,
        out_shape=(jax.ShapeDtypeStruct((1, 1), jnp.float32),
                   jax.ShapeDtypeStruct((a, a_pad), jnp.float32)),
        grid_spec=pltpu.PrefetchScalarGridSpec(
            num_scalar_prefetch=0,
            grid=(num_tiles,),
            in_specs=in_specs,
            out_specs=out_specs,
            scratch_shapes=scratch_shapes),
        compiler_params=pltpu.CompilerParams(
            dimension_semantics=("arbitrary",),     # cross-tile accumulators serialize
            vmem_limit_bytes=64 * 1024 * 1024),
        cost_estimate=pl.CostEstimate(
            flops=int(flops),
            transcendentals=int(transcendentals),
            bytes_accessed=int(bytes_accessed)),
    )(*in_arrays)
    return loss[0, 0], p_full[:, :a]


def _reference(s, v_h, v_t, v_f, v_e_hard, prob, f_prob,
               *, false_negative_size=4, tau=0.05, plus=True):
    # pure-JAX mirror of the PyTorch forward, for a sanity check
    a, b = v_h.shape
    v_h_t = jnp.concatenate((v_t, v_h, v_e_hard), axis=0)
    num_neg = v_h_t.shape[1]
    p_score = s @ v_h_t.T
    f_score = jnp.einsum('ab,akb->ak', s, v_f.reshape(a, false_negative_size, b))
    de2_sum = tau * jnp.sum(jnp.exp(f_score) * f_prob, axis=1)
    eye = jnp.eye(a, p_score.shape[1], dtype=p_score.dtype)
    p_score = p_score - eye
    p_score_exp = jnp.exp(p_score)
    nu = jnp.sum(p_score_exp * eye, axis=1)
    de1_sum = jnp.sum(p_score_exp * prob, axis=1) - nu
    de = jnp.maximum(de1_sum - de2_sum, 0.0)
    loss = -jnp.mean(jnp.log(nu / (nu + num_neg / (1.0 - tau) * de)))
    if plus:
        logits = p_score[:, :a].T
        lse = jax.nn.logsumexp(logits, axis=1)
        loss = loss + jnp.mean(lse - jnp.diagonal(logits))
    return loss, p_score[:, :a]


if __name__ == "__main__":
    # small shapes: A (batch) = 16, hidden B = 128 (lane-aligned), hard rows H = 8, NEG = 4
    A, B, H, NEG = 16, 128, 8, 4
    key = jax.random.PRNGKey(0)
    ks = jax.random.split(key, 7)
    s        = 0.1 * jax.random.normal(ks[0], (A, B), jnp.float32)
    v_h      = 0.1 * jax.random.normal(ks[1], (A, B), jnp.float32)
    v_t      = 0.1 * jax.random.normal(ks[2], (A, B), jnp.float32)
    v_f      = 0.1 * jax.random.normal(ks[3], (A * NEG, B), jnp.float32)
    v_e_hard = 0.1 * jax.random.normal(ks[4], (H, B), jnp.float32)
    prob     = jax.random.uniform(ks[5], (A, 2 * A + H), jnp.float32)
    f_prob   = jax.random.uniform(ks[6], (A, NEG), jnp.float32)

    loss, p_score_a = inbatch_hard_loss(
        s, v_h, v_t, v_f, v_e_hard, prob, f_prob,
        false_negative_size=NEG, tau=0.05, plus=True, tile_a=8)   # 2 row tiles
    jax.block_until_ready((loss, p_score_a))

    ref_loss, ref_ps = _reference(
        s, v_h, v_t, v_f, v_e_hard, prob, f_prob,
        false_negative_size=NEG, tau=0.05, plus=True)
    assert jnp.allclose(loss, ref_loss, rtol=1e-3, atol=1e-3), (loss, ref_loss)
    assert jnp.allclose(p_score_a, ref_ps, rtol=1e-3, atol=1e-3)

    print("KERNEL_OK")
</pallas_src>

<mosaic_0001>
module attributes {stable_mosaic.version = 11 : i64} {
  func.func @_inbatch_hard_loss_kernel(%arg0: i32, %arg1: memref<8x128xf32, #tpu.memory_space<vmem>>, %arg2: memref<16x128xf32, #tpu.memory_space<any>>, %arg3: memref<16x128xf32, #tpu.memory_space<any>>, %arg4: memref<8x128xf32, #tpu.memory_space<any>>, %arg5: memref<8x512xf32, #tpu.memory_space<vmem>>, %arg6: memref<8x128xf32, #tpu.memory_space<vmem>>, %arg7: memref<8x4xf32, #tpu.memory_space<vmem>>, %arg8: memref<1x1xf32, #tpu.memory_space<vmem>>, %arg9: memref<8x128xf32, #tpu.memory_space<vmem>>, %arg10: memref<128x128xf32, #tpu.memory_space<vmem>>, %arg11: memref<3x!tpu.dma_semaphore, #tpu.memory_space<semaphore_mem>>, %arg12: memref<1x1xf32, #tpu.memory_space<vmem>>, %arg13: memref<1x1xf32, #tpu.memory_space<vmem>>, %arg14: memref<1x128xf32, #tpu.memory_space<vmem>>, %arg15: memref<1x128xf32, #tpu.memory_space<vmem>>) attributes {dimension_semantics = [#tpu.dimension_semantics<arbitrary>], iteration_bounds = array<i64: 2>, scalar_prefetch = 0 : i64, scratch_operands = 6 : i64, tpu.core_type = #tpu.core_type<tc>, window_params = [{transform_indices = @transform_0, window_bounds = array<i64: 8, 128>}, {}, {}, {}, {transform_indices = @transform_4, window_bounds = array<i64: 8, 512>}, {transform_indices = @transform_5, window_bounds = array<i64: 8, 128>}, {transform_indices = @transform_6, window_bounds = array<i64: 8, 4>}, {pipeline_mode = #tpu.pipeline_mode<synchronous>, transform_indices = @transform_7, window_bounds = array<i64: 1, 1>}, {transform_indices = @transform_8, window_bounds = array<i64: 8, 128>}]} {
    %c0_i32 = arith.constant 0 : i32
    %0 = arith.cmpi eq, %arg0, %c0_i32 : i32
    %1 = arith.extui %0 : i1 to i32
    %c0_i32_0 = arith.constant 0 : i32
    %2 = arith.cmpi ne, %1, %c0_i32_0 : i32
    scf.if %2 {
      %c0_i32_52 = arith.constant 0 : i32
      %c0_i32_53 = arith.constant 0 : i32
      %c0_i32_54 = arith.constant 0 : i32
      %105 = tpu.memref_slice %arg10[%c0_i32_53, %c0_i32_54] : memref<128x128xf32, #tpu.memory_space<vmem>> -> memref<16x128xf32, #tpu.memory_space<vmem>>
      %106 = tpu.memref_slice %arg11[%c0_i32_52] : memref<3x!tpu.dma_semaphore, #tpu.memory_space<semaphore_mem>> -> memref<1x!tpu.dma_semaphore, #tpu.memory_space<semaphore_mem>>
      %107 = tpu.memref_squeeze %106 : memref<1x!tpu.dma_semaphore, #tpu.memory_space<semaphore_mem>> -> memref<!tpu.dma_semaphore, #tpu.memory_space<semaphore_mem>>
      tpu.enqueue_dma source(%arg2 : memref<16x128xf32, #tpu.memory_space<any>>) target(%105 : memref<16x128xf32, #tpu.memory_space<vmem>>) target_semaphore(%107 : memref<!tpu.dma_semaphore, #tpu.memory_space<semaphore_mem>>)
      %c1_i32_55 = arith.constant 1 : i32
      %c16_i32 = arith.constant 16 : i32
      %c0_i32_56 = arith.constant 0 : i32
      %108 = tpu.memref_slice %arg10[%c16_i32, %c0_i32_56] : memref<128x128xf32, #tpu.memory_space<vmem>> -> memref<16x128xf32, #tpu.memory_space<vmem>>
      %109 = tpu.memref_slice %arg11[%c1_i32_55] : memref<3x!tpu.dma_semaphore, #tpu.memory_space<semaphore_mem>> -> memref<1x!tpu.dma_semaphore, #tpu.memory_space<semaphore_mem>>
      %110 = tpu.memref_squeeze %109 : memref<1x!tpu.dma_semaphore, #tpu.memory_space<semaphore_mem>> -> memref<!tpu.dma_semaphore, #tpu.memory_space<semaphore_mem>>
      tpu.enqueue_dma source(%arg3 : memref<16x128xf32, #tpu.memory_space<any>>) target(%108 : memref<16x128xf32, #tpu.memory_space<vmem>>) target_semaphore(%110 : memref<!tpu.dma_semaphore, #tpu.memory_space<semaphore_mem>>)
      %c2_i32 = arith.constant 2 : i32
      %c32_i32 = arith.constant 32 : i32
      %c0_i32_57 = arith.constant 0 : i32
      %111 = tpu.memref_slice %arg10[%c32_i32, %c0_i32_57] : memref<128x128xf32, #tpu.memory_space<vmem>> -> memref<8x128xf32, #tpu.memory_space<vmem>>
      %112 = tpu.memref_slice %arg11[%c2_i32] : memref<3x!tpu.dma_semaphore, #tpu.memory_space<semaphore_mem>> -> memref<1x!tpu.dma_semaphore, #tpu.memory_space<semaphore_mem>>
      %113 = tpu.memref_squeeze %112 : memref<1x!tpu.dma_semaphore, #tpu.memory_space<semaphore_mem>> -> memref<!tpu.dma_semaphore, #tpu.memory_space<semaphore_mem>>
      tpu.enqueue_dma source(%arg4 : memref<8x128xf32, #tpu.memory_space<any>>) target(%111 : memref<8x128xf32, #tpu.memory_space<vmem>>) target_semaphore(%113 : memref<!tpu.dma_semaphore, #tpu.memory_space<semaphore_mem>>)
      %cst_58 = arith.constant 0.000000e+00 : f32
      %114 = vector.broadcast %cst_58 : f32 to vector<88x128xf32>
      %c40 = arith.constant 40 : index
      %c0_59 = arith.constant 0 : index
      %115 = vector.load %arg10[%c40, %c0_59] : memref<128x128xf32, #tpu.memory_space<vmem>>, vector<88x128xf32>
      tpu.vector_store %arg10[%c40, %c0_59], %114 {strides = array<i32>} : memref<128x128xf32, #tpu.memory_space<vmem>>, vector<88x128xf32>,
      %cst_60 = arith.constant 0.000000e+00 : f32
      %116 = vector.broadcast %cst_60 : f32 to vector<1x1xf32>
      %c0_61 = arith.constant 0 : index
      %c0_62 = arith.constant 0 : index
      %117 = vector.load %arg12[%c0_61, %c0_62] : memref<1x1xf32, #tpu.memory_space<vmem>>, vector<1x1xf32>
      tpu.vector_store %arg12[%c0_61, %c0_62], %116 {strides = array<i32>} : memref<1x1xf32, #tpu.memory_space<vmem>>, vector<1x1xf32>,
      %cst_63 = arith.constant 0.000000e+00 : f32
      %118 = vector.broadcast %cst_63 : f32 to vector<1x1xf32>
      %c0_64 = arith.constant 0 : index
      %c0_65 = arith.constant 0 : index
      %119 = vector.load %arg13[%c0_64, %c0_65] : memref<1x1xf32, #tpu.memory_space<vmem>>, vector<1x1xf32>
      tpu.vector_store %arg13[%c0_64, %c0_65], %118 {strides = array<i32>} : memref<1x1xf32, #tpu.memory_space<vmem>>, vector<1x1xf32>,
      %cst_66 = arith.constant 0xFF800000 : f32
      %120 = vector.broadcast %cst_66 : f32 to vector<1x128xf32>
      %c0_67 = arith.constant 0 : index
      %c0_68 = arith.constant 0 : index
      %121 = vector.load %arg14[%c0_67, %c0_68] : memref<1x128xf32, #tpu.memory_space<vmem>>, vector<1x128xf32>
      tpu.vector_store %arg14[%c0_67, %c0_68], %120 {strides = array<i32>} : memref<1x128xf32, #tpu.memory_space<vmem>>, vector<1x128xf32>,
      %cst_69 = arith.constant 0.000000e+00 : f32
      %122 = vector.broadcast %cst_69 : f32 to vector<1x128xf32>
      %c0_70 = arith.constant 0 : index
      %c0_71 = arith.constant 0 : index
      %123 = vector.load %arg15[%c0_70, %c0_71] : memref<1x128xf32, #tpu.memory_space<vmem>>, vector<1x128xf32>
      tpu.vector_store %arg15[%c0_70, %c0_71], %122 {strides = array<i32>} : memref<1x128xf32, #tpu.memory_space<vmem>>, vector<1x128xf32>,
      %c0_i32_72 = arith.constant 0 : i32
      %c0_i32_73 = arith.constant 0 : i32
      %c0_i32_74 = arith.constant 0 : i32
      %124 = tpu.memref_slice %arg10[%c0_i32_73, %c0_i32_74] : memref<128x128xf32, #tpu.memory_space<vmem>> -> memref<16x128xf32, #tpu.memory_space<vmem>>
      %125 = tpu.memref_slice %arg11[%c0_i32_72] : memref<3x!tpu.dma_semaphore, #tpu.memory_space<semaphore_mem>> -> memref<1x!tpu.dma_semaphore, #tpu.memory_space<semaphore_mem>>
      %126 = tpu.memref_squeeze %125 : memref<1x!tpu.dma_semaphore, #tpu.memory_space<semaphore_mem>> -> memref<!tpu.dma_semaphore, #tpu.memory_space<semaphore_mem>>
      tpu.wait_dma2 semaphore(%126 : memref<!tpu.dma_semaphore, #tpu.memory_space<semaphore_mem>>) src(%arg2 : memref<16x128xf32, #tpu.memory_space<any>>) dst(%124 : memref<16x128xf32, #tpu.memory_space<vmem>>)
      %c1_i32_75 = arith.constant 1 : i32
      %c16_i32_76 = arith.constant 16 : i32
      %c0_i32_77 = arith.constant 0 : i32
      %127 = tpu.memref_slice %arg10[%c16_i32_76, %c0_i32_77] : memref<128x128xf32, #tpu.memory_space<vmem>> -> memref<16x128xf32, #tpu.memory_space<vmem>>
      %128 = tpu.memref_slice %arg11[%c1_i32_75] : memref<3x!tpu.dma_semaphore, #tpu.memory_space<semaphore_mem>> -> memref<1x!tpu.dma_semaphore, #tpu.memory_space<semaphore_mem>>
      %129 = tpu.memref_squeeze %128 : memref<1x!tpu.dma_semaphore, #tpu.memory_space<semaphore_mem>> -> memref<!tpu.dma_semaphore, #tpu.memory_space<semaphore_mem>>
      tpu.wait_dma2 semaphore(%129 : memref<!tpu.dma_semaphore, #tpu.memory_space<semaphore_mem>>) src(%arg3 : memref<16x128xf32, #tpu.memory_space<any>>) dst(%127 : memref<16x128xf32, #tpu.memory_space<vmem>>)
      %c2_i32_78 = arith.constant 2 : i32
      %c32_i32_79 = arith.constant 32 : i32
      %c0_i32_80 = arith.constant 0 : i32
      %130 = tpu.memref_slice %arg10[%c32_i32_79, %c0_i32_80] : memref<128x128xf32, #tpu.memory_space<vmem>> -> memref<8x128xf32, #tpu.memory_space<vmem>>
      %131 = tpu.memref_slice %arg11[%c2_i32_78] : memref<3x!tpu.dma_semaphore, #tpu.memory_space<semaphore_mem>> -> memref<1x!tpu.dma_semaphore, #tpu.memory_space<semaphore_mem>>
      %132 = tpu.memref_squeeze %131 : memref<1x!tpu.dma_semaphore, #tpu.memory_space<semaphore_mem>> -> memref<!tpu.dma_semaphore, #tpu.memory_space<semaphore_mem>>
      tpu.wait_dma2 semaphore(%132 : memref<!tpu.dma_semaphore, #tpu.memory_space<semaphore_mem>>) src(%arg4 : memref<8x128xf32, #tpu.memory_space<any>>) dst(%130 : memref<8x128xf32, #tpu.memory_space<vmem>>)
    } else {
    }
    %c0 = arith.constant 0 : index
    %c0_1 = arith.constant 0 : index
    %3 = vector.load %arg1[%c0, %c0_1] : memref<8x128xf32, #tpu.memory_space<vmem>>, vector<8x128xf32>
    %c0_2 = arith.constant 0 : index
    %c0_3 = arith.constant 0 : index
    %4 = vector.load %arg10[%c0_2, %c0_3] : memref<128x128xf32, #tpu.memory_space<vmem>>, vector<128x128xf32>
    %cst = arith.constant dense<0.000000e+00> : vector<8x128xf32>
    %5 = tpu.matmul %3, %4, %cst {dimension_numbers = #tpu.dot_dimension_numbers<[1], [1], [0], [0], [0, 0, 1, 0], [], []>} : vector<8x128xf32>, vector<128x128xf32>, vector<8x128xf32> -> vector<8x128xf32>
    %c8_i32 = arith.constant 8 : i32
    %6 = arith.muli %arg0, %c8_i32 : i32
    %7 = tpu.iota {dimensions = array<i32: 0>} : vector<8x128xi32>
    %8 = vector.broadcast %6 : i32 to vector<8x128xi32>
    %9 = arith.addi %8, %7 : vector<8x128xi32>
    %10 = tpu.iota {dimensions = array<i32: 1>} : vector<8x128xi32>
    %11 = arith.cmpi eq, %9, %10 : vector<8x128xi32>
    %12 = arith.extui %11 : vector<8x128xi1> to vector<8x128xi32>
    %13 = arith.sitofp %12 : vector<8x128xi32> to vector<8x128xf32>
    %14 = arith.subf %5, %13 : vector<8x128xf32>
    %15 = math.exp %14 : vector<8x128xf32>
    %c0_4 = arith.constant 0 : index
    %c0_5 = arith.constant 0 : index
    %16 = vector.load %arg6[%c0_4, %c0_5] : memref<8x128xf32, #tpu.memory_space<vmem>>, vector<8x128xf32>
    %cst_6 = arith.constant 0.000000e+00 : f32
    %17 = vector.broadcast %cst_6 : f32 to vector<8x128xf32>
    %18 = arith.select %11, %15, %17 : vector<8x128xi1>, vector<8x128xf32>
    %cst_7 = arith.constant dense<0.000000e+00> : vector<8xf32>
    %19 = vector.multi_reduction <add>, %18, %cst_7 [1] : vector<8x128xf32> to vector<8xf32>
    %20 = vector.shape_cast %19 : vector<8xf32> to vector<8x1xf32>
    %21 = arith.mulf %15, %16 : vector<8x128xf32>
    %cst_8 = arith.constant dense<0.000000e+00> : vector<8xf32>
    %22 = vector.multi_reduction <add>, %21, %cst_8 [1] : vector<8x128xf32> to vector<8xf32>
    %23 = vector.shape_cast %22 : vector<8xf32> to vector<8x1xf32>
    %24 = arith.subf %23, %20 : vector<8x1xf32>
    %c0_9 = arith.constant 0 : index
    %c0_10 = arith.constant 0 : index
    %25 = vector.load %arg1[%c0_9, %c0_10] : memref<8x128xf32, #tpu.memory_space<vmem>>, vector<8x128xf32>
    %c0_11 = arith.constant 0 : index
    %c0_12 = arith.constant 0 : index
    %26 = vector.load %arg7[%c0_11, %c0_12] : memref<8x4xf32, #tpu.memory_space<vmem>>, vector<8x4xf32>
    %cst_13 = arith.constant 0.000000e+00 : f32
    %27 = vector.broadcast %cst_13 : f32 to vector<8x1xf32>
    %c0_14 = arith.constant 0 : index
    %c0_15 = arith.constant 0 : index
    %28 = vector.load %arg5[%c0_14, %c0_15] : memref<8x512xf32, #tpu.memory_space<vmem>>, vector<8x128xf32>
    %29 = arith.mulf %25, %28 : vector<8x128xf32>
    %cst_16 = arith.constant dense<0.000000e+00> : vector<8xf32>
    %30 = vector.multi_reduction <add>, %29, %cst_16 [1] : vector<8x128xf32> to vector<8xf32>
    %31 = vector.shape_cast %30 : vector<8xf32> to vector<8x1xf32>
    %32 = math.exp %31 : vector<8x1xf32>
    %33 = vector.extract_strided_slice %26 {offsets = [0, 0], sizes = [8, 1], strides = [1, 1]} : vector<8x4xf32> to vector<8x1xf32>
    %34 = arith.mulf %32, %33 : vector<8x1xf32>
    %35 = arith.addf %27, %34 : vector<8x1xf32>
    %c0_17 = arith.constant 0 : index
    %c128 = arith.constant 128 : index
    %36 = vector.load %arg5[%c0_17, %c128] : memref<8x512xf32, #tpu.memory_space<vmem>>, vector<8x128xf32>
    %37 = arith.mulf %25, %36 : vector<8x128xf32>
    %cst_18 = arith.constant dense<0.000000e+00> : vector<8xf32>
    %38 = vector.multi_reduction <add>, %37, %cst_18 [1] : vector<8x128xf32> to vector<8xf32>
    %39 = vector.shape_cast %38 : vector<8xf32> to vector<8x1xf32>
    %40 = math.exp %39 : vector<8x1xf32>
    %41 = vector.extract_strided_slice %26 {offsets = [0, 1], sizes = [8, 1], strides = [1, 1]} : vector<8x4xf32> to vector<8x1xf32>
    %42 = arith.mulf %40, %41 : vector<8x1xf32>
    %43 = arith.addf %35, %42 : vector<8x1xf32>
    %c0_19 = arith.constant 0 : index
    %c256 = arith.constant 256 : index
    %44 = vector.load %arg5[%c0_19, %c256] : memref<8x512xf32, #tpu.memory_space<vmem>>, vector<8x128xf32>
    %45 = arith.mulf %25, %44 : vector<8x128xf32>
    %cst_20 = arith.constant dense<0.000000e+00> : vector<8xf32>
    %46 = vector.multi_reduction <add>, %45, %cst_20 [1] : vector<8x128xf32> to vector<8xf32>
    %47 = vector.shape_cast %46 : vector<8xf32> to vector<8x1xf32>
    %48 = math.exp %47 : vector<8x1xf32>
    %49 = vector.extract_strided_slice %26 {offsets = [0, 2], sizes = [8, 1], strides = [1, 1]} : vector<8x4xf32> to vector<8x1xf32>
    %50 = arith.mulf %48, %49 : vector<8x1xf32>
    %51 = arith.addf %43, %50 : vector<8x1xf32>
    %c0_21 = arith.constant 0 : index
    %c384 = arith.constant 384 : index
    %52 = vector.load %arg5[%c0_21, %c384] : memref<8x512xf32, #tpu.memory_space<vmem>>, vector<8x128xf32>
    %53 = arith.mulf %25, %52 : vector<8x128xf32>
    %cst_22 = arith.constant dense<0.000000e+00> : vector<8xf32>
    %54 = vector.multi_reduction <add>, %53, %cst_22 [1] : vector<8x128xf32> to vector<8xf32>
    %55 = vector.shape_cast %54 : vector<8xf32> to vector<8x1xf32>
    %56 = math.exp %55 : vector<8x1xf32>
    %57 = vector.extract_strided_slice %26 {offsets = [0, 3], sizes = [8, 1], strides = [1, 1]} : vector<8x4xf32> to vector<8x1xf32>
    %58 = arith.mulf %56, %57 : vector<8x1xf32>
    %59 = arith.addf %51, %58 : vector<8x1xf32>
    %cst_23 = arith.constant 5.000000e-02 : f32
    %60 = vector.broadcast %cst_23 : f32 to vector<8x1xf32>
    %61 = arith.mulf %60, %59 : vector<8x1xf32>
    %62 = arith.subf %24, %61 : vector<8x1xf32>
    %cst_24 = arith.constant 0.000000e+00 : f32
    %63 = vector.broadcast %cst_24 : f32 to vector<8x1xf32>
    %64 = arith.maximumf %62, %63 : vector<8x1xf32>
    %cst_25 = arith.constant 134.736847 : f32
    %65 = vector.broadcast %cst_25 : f32 to vector<8x1xf32>
    %66 = arith.mulf %65, %64 : vector<8x1xf32>
    %67 = arith.addf %20, %66 : vector<8x1xf32>
    %68 = arith.divf %20, %67 : vector<8x1xf32>
    %69 = math.log %68 : vector<8x1xf32>
    %c0_26 = arith.constant 0 : index
    %c0_27 = arith.constant 0 : index
    %70 = vector.load %arg12[%c0_26, %c0_27] : memref<1x1xf32, #tpu.memory_space<vmem>>, vector<1x1xf32>
    %cst_28 = arith.constant dense<0.000000e+00> : vector<1xf32>
    %71 = vector.multi_reduction <add>, %69, %cst_28 [0] : vector<8x1xf32> to vector<1xf32>
    %72 = vector.shape_cast %71 : vector<1xf32> to vector<1x1xf32>
    %73 = arith.addf %70, %72 : vector<1x1xf32>
    %c0_29 = arith.constant 0 : index
    %c0_30 = arith.constant 0 : index
    %74 = vector.load %arg12[%c0_29, %c0_30] : memref<1x1xf32, #tpu.memory_space<vmem>>, vector<1x1xf32>
    tpu.vector_store %arg12[%c0_29, %c0_30], %73 {strides = array<i32>} : memref<1x1xf32, #tpu.memory_space<vmem>>, vector<1x1xf32>,
    %cst_31 = arith.constant 0.000000e+00 : f32
    %75 = vector.broadcast %cst_31 : f32 to vector<8x128xf32>
    %76 = arith.select %11, %14, %75 : vector<8x128xi1>, vector<8x128xf32>
    %cst_32 = arith.constant dense<0.000000e+00> : vector<8xf32>
    %77 = vector.multi_reduction <add>, %76, %cst_32 [1] : vector<8x128xf32> to vector<8xf32>
    %78 = vector.shape_cast %77 : vector<8xf32> to vector<8x1xf32>
    %c0_33 = arith.constant 0 : index
    %c0_34 = arith.constant 0 : index
    %79 = vector.load %arg13[%c0_33, %c0_34] : memref<1x1xf32, #tpu.memory_space<vmem>>, vector<1x1xf32>
    %cst_35 = arith.constant dense<0.000000e+00> : vector<1xf32>
    %80 = vector.multi_reduction <add>, %78, %cst_35 [0] : vector<8x1xf32> to vector<1xf32>
    %81 = vector.shape_cast %80 : vector<1xf32> to vector<1x1xf32>
    %82 = arith.addf %79, %81 : vector<1x1xf32>
    %c0_36 = arith.constant 0 : index
    %c0_37 = arith.constant 0 : index
    %83 = vector.load %arg13[%c0_36, %c0_37] : memref<1x1xf32, #tpu.memory_space<vmem>>, vector<1x1xf32>
    tpu.vector_store %arg13[%c0_36, %c0_37], %82 {strides = array<i32>} : memref<1x1xf32, #tpu.memory_space<vmem>>, vector<1x1xf32>,
    %c0_38 = arith.constant 0 : index
    %c0_39 = arith.constant 0 : index
    %84 = vector.load %arg14[%c0_38, %c0_39] : memref<1x128xf32, #tpu.memory_space<vmem>>, vector<1x128xf32>
    %c0_40 = arith.constant 0 : index
    %c0_41 = arith.constant 0 : index
    %85 = vector.load %arg15[%c0_40, %c0_41] : memref<1x128xf32, #tpu.memory_space<vmem>>, vector<1x128xf32>
    %cst_42 = arith.constant dense<0xFF800000> : vector<128xf32>
    %86 = vector.multi_reduction <maximumf>, %14, %cst_42 [0] : vector<8x128xf32> to vector<128xf32>
    %87 = vector.shape_cast %86 : vector<128xf32> to vector<1x128xf32>
    %88 = arith.maximumf %84, %87 : vector<1x128xf32>
    %cst_43 = arith.constant dense<0.000000e+00> : vector<128xf32>
    %89 = vector.multi_reduction <add>, %15, %cst_43 [0] : vector<8x128xf32> to vector<128xf32>
    %90 = vector.shape_cast %89 : vector<128xf32> to vector<1x128xf32>
    %91 = arith.subf %84, %88 : vector<1x128xf32>
    %92 = math.exp %91 : vector<1x128xf32>
    %93 = arith.mulf %85, %92 : vector<1x128xf32>
    %cst_44 = arith.constant 0.000000e+00 : f32
    %94 = vector.broadcast %cst_44 : f32 to vector<1x128xf32>
    %95 = arith.subf %94, %88 : vector<1x128xf32>
    %96 = math.exp %95 : vector<1x128xf32>
    %97 = arith.mulf %90, %96 : vector<1x128xf32>
    %98 = arith.addf %93, %97 : vector<1x128xf32>
    %c0_45 = arith.constant 0 : index
    %c0_46 = arith.constant 0 : index
    %99 = vector.load %arg15[%c0_45, %c0_46] : memref<1x128xf32, #tpu.memory_space<vmem>>, vector<1x128xf32>
    tpu.vector_store %arg15[%c0_45, %c0_46], %98 {strides = array<i32>} : memref<1x128xf32, #tpu.memory_space<vmem>>, vector<1x128xf32>,
    %c0_47 = arith.constant 0 : index
    %c0_48 = arith.constant 0 : index
    %100 = vector.load %arg14[%c0_47, %c0_48] : memref<1x128xf32, #tpu.memory_space<vmem>>, vector<1x128xf32>
    tpu.vector_store %arg14[%c0_47, %c0_48], %88 {strides = array<i32>} : memref<1x128xf32, #tpu.memory_space<vmem>>, vector<1x128xf32>,
    %c0_49 = arith.constant 0 : index
    %c0_50 = arith.constant 0 : index
    %101 = vector.load %arg9[%c0_49, %c0_50] : memref<8x128xf32, #tpu.memory_space<vmem>>, vector<8x128xf32>
    tpu.vector_store %arg9[%c0_49, %c0_50], %14 {strides = array<i32>} : memref<8x128xf32, #tpu.memory_space<vmem>>, vector<8x128xf32>,
    %c1_i32 = arith.constant 1 : i32
    %102 = arith.cmpi eq, %arg0, %c1_i32 : i32
    %103 = arith.extui %102 : i1 to i32
    %c0_i32_51 = arith.constant 0 : i32
    %104 = arith.cmpi ne, %103, %c0_i32_51 : i32
    scf.if %104 {
      %c0_52 = arith.constant 0 : index
      %c0_53 = arith.constant 0 : index
      %105 = vector.load %arg12[%c0_52, %c0_53] : memref<1x1xf32, #tpu.memory_space<vmem>>, vector<1x1xf32>
      %cst_54 = arith.constant 0.000000e+00 : f32
      %106 = vector.broadcast %cst_54 : f32 to vector<1x1xf32>
      %107 = arith.subf %106, %105 : vector<1x1xf32>
      %cst_55 = arith.constant 6.250000e-02 : f32
      %108 = vector.broadcast %cst_55 : f32 to vector<1x1xf32>
      %109 = arith.mulf %107, %108 : vector<1x1xf32>
      %c0_56 = arith.constant 0 : index
      %c0_57 = arith.constant 0 : index
      %110 = vector.load %arg15[%c0_56, %c0_57] : memref<1x128xf32, #tpu.memory_space<vmem>>, vector<1x128xf32>
      %111 = math.log %110 : vector<1x128xf32>
      %c0_58 = arith.constant 0 : index
      %c0_59 = arith.constant 0 : index
      %112 = vector.load %arg14[%c0_58, %c0_59] : memref<1x128xf32, #tpu.memory_space<vmem>>, vector<1x128xf32>
      %113 = arith.addf %111, %112 : vector<1x128xf32>
      %114 = tpu.iota {dimensions = array<i32: 1>} : vector<1x128xi32>
      %c16_i32 = arith.constant 16 : i32
      %115 = vector.broadcast %c16_i32 : i32 to vector<1x128xi32>
      %116 = arith.cmpi slt, %114, %115 : vector<1x128xi32>
      %cst_60 = arith.constant 0.000000e+00 : f32
      %117 = vector.broadcast %cst_60 : f32 to vector<1x128xf32>
      %118 = arith.select %116, %113, %117 : vector<1x128xi1>, vector<1x128xf32>
      %cst_61 = arith.constant dense<0.000000e+00> : vector<1xf32>
      %119 = vector.multi_reduction <add>, %118, %cst_61 [1] : vector<1x128xf32> to vector<1xf32>
      %120 = vector.shape_cast %119 : vector<1xf32> to vector<1x1xf32>
      %c0_62 = arith.constant 0 : index
      %c0_63 = arith.constant 0 : index
      %121 = vector.load %arg13[%c0_62, %c0_63] : memref<1x1xf32, #tpu.memory_space<vmem>>, vector<1x1xf32>
      %122 = arith.subf %120, %121 : vector<1x1xf32>
      %cst_64 = arith.constant 6.250000e-02 : f32
      %123 = vector.broadcast %cst_64 : f32 to vector<1x1xf32>
      %124 = arith.mulf %122, %123 : vector<1x1xf32>
      %125 = arith.addf %109, %124 : vector<1x1xf32>
      %c0_65 = arith.constant 0 : index
      %c0_66 = arith.constant 0 : index
      %126 = vector.load %arg8[%c0_65, %c0_66] : memref<1x1xf32, #tpu.memory_space<vmem>>, vector<1x1xf32>
      tpu.vector_store %arg8[%c0_65, %c0_66], %125 {strides = array<i32>} : memref<1x1xf32, #tpu.memory_space<vmem>>, vector<1x1xf32>,
    } else {
    }
    return
  }
  func.func @transform_0(%arg0: i32) -> (i32, i32) {
    %c0_i32 = arith.constant 0 : i32
    %c0_i32_0 = arith.constant 0 : i32
    return %arg0, %c0_i32 : i32, i32
  }
  func.func @transform_4(%arg0: i32) -> (i32, i32) {
    %c0_i32 = arith.constant 0 : i32
    %c0_i32_0 = arith.constant 0 : i32
    return %arg0, %c0_i32 : i32, i32
  }
  func.func @transform_5(%arg0: i32) -> (i32, i32) {
    %c0_i32 = arith.constant 0 : i32
    %c0_i32_0 = arith.constant 0 : i32
    return %arg0, %c0_i32 : i32, i32
  }
  func.func @transform_6(%arg0: i32) -> (i32, i32) {
    %c0_i32 = arith.constant 0 : i32
    %c0_i32_0 = arith.constant 0 : i32
    return %arg0, %c0_i32 : i32, i32
  }
  func.func @transform_7(%arg0: i32) -> (i32, i32) {
    %c0_i32 = arith.constant 0 : i32
    %c0_i32_0 = arith.constant 0 : i32
    %c0_i32_1 = arith.constant 0 : i32
    return %c0_i32, %c0_i32_0 : i32, i32
  }
  func.func @transform_8(%arg0: i32) -> (i32, i32) {
    %c0_i32 = arith.constant 0 : i32
    %c0_i32_0 = arith.constant 0 : i32
    return %arg0, %c0_i32 : i32, i32
  }
}

</mosaic_0001>

<llo_original>
// kernel: tpu_custom_call.1
$region0: #{tpu_custom_call.1}
  #allocation0 [shape = 'u32[]', space=smem, size = 0x4, offset = 0x4, fixed_abs, tag = 'smem constant byte address 0x4 - core index']
  #allocation1 [shape = 'u32[144,128]{1,0:T(1,128)}', space=vmem, size = 0x12000, scoped, tag = 'internal scratch']
  #allocation2 [shape = 'f32[128,128]{1,0:T(8,128)}', space=vmem, size = 0x10000, scoped, tag = 'scratch operand']
  #allocation3 [shape = 's32[3]{0}', space=sflag, size = 0xc, scoped, tag = 'scratch operand']
  #allocation4 [shape = 'f32[1,1]{1,0:T(1,128)}', space=vmem, size = 0x200, scoped, tag = 'scratch operand']
  #allocation5 [shape = 'f32[1,1]{1,0:T(1,128)}', space=vmem, size = 0x200, scoped, tag = 'scratch operand']
  #allocation6 [shape = 'f32[1,128]{1,0:T(1,128)}', space=vmem, size = 0x200, scoped, tag = 'scratch operand']
  #allocation7 [shape = 'f32[1,128]{1,0:T(1,128)}', space=vmem, size = 0x200, scoped, tag = 'scratch operand']
  #allocation19 [shape = 's32[]', space=sflag, size = 0x4, offset = 0, fixed_abs, tag = 'sflag constant byte address 0x0 - dummy sync flag']
  #allocation20 [shape = 's32[]', space=sflag, size = 0x4, offset = 0, fixed_abs, tag = 'sflag constant byte address 0x0 - dummy sync flag']
  #allocation21 [shape = 'u32[]', space=smem, size = 0x4, offset = 0x44, fixed_abs, tag = 'smem constant byte address 0x44 - assertion arg 0']
  #allocation22 [shape = 'u32[]', space=smem, size = 0x4, offset = 0x48, fixed_abs, tag = 'smem constant byte address 0x48 - assertion arg 1']
  #allocation23 [shape = 's32[]', space=sflag, size = 0x4, offset = 0, fixed_abs, tag = 'sflag constant byte address 0x0 - dummy sync flag']
  #allocation24 [shape = 's32[]', space=sflag, size = 0x4, offset = 0, fixed_abs, tag = 'sflag constant byte address 0x0 - dummy sync flag']
  #allocation25 [shape = 's32[]', space=sflag, size = 0x4, offset = 0, fixed_abs, tag = 'sflag constant byte address 0x0 - dummy sync flag']
  #allocation26 [shape = 's32[]', space=sflag, size = 0x4, offset = 0, fixed_abs, tag = 'sflag constant byte address 0x0 - dummy sync flag']
  %s0 = inlined_call_operand.hbm [shape: f32[16,128], index: 0, kind: input, shape index: {}]
  %s1 = inlined_call_operand.hbm [shape: f32[16,128], index: 1, kind: input, shape index: {}]
  %s2 = inlined_call_operand.hbm [shape: f32[16,128], index: 2, kind: input, shape index: {}]
  %s3 = inlined_call_operand.hbm [shape: f32[8,128], index: 3, kind: input, shape index: {}]
  %s4 = inlined_call_operand.hbm [shape: f32[16,512], index: 4, kind: input, shape index: {}]
  %s5 = inlined_call_operand.hbm [shape: f32[16,128], index: 5, kind: input, shape index: {}]
  %s6 = inlined_call_operand.hbm [shape: f32[16,4], index: 6, kind: input, shape index: {}]
  %s7 = inlined_call_operand.hbm [shape: f32[1,1], index: 7, kind: output, shape index: {0}]
  %s8 = inlined_call_operand.hbm [shape: f32[16,128], index: 8, kind: output, shape index: {1}]
  %9 = xla_tuple %s7, %s8
  %s10 = sld [smem:[#allocation0]]
  $region93: #{tpu_custom_call.1} parent=0
    _
  %s12 = ssub.s32 1, %s10
  %s13 = scalar_select 0, %s12, %s10
  $region1: #{tpu_custom_call.1} parent=0
    #allocation8 [shape = 'u8[8192]{0}', space=vmem, size = 0x2000, scoped, tag = 'input window, operand 0']
    #allocation9 [shape = 's32[2]{0}', space=sflag, size = 0x8, scoped, tag = 'scoped memory for tpu_custom_call.1']
    #allocation10 [shape = 's32[2]{0}', space=sflag, size = 0x8, scoped, tag = 'scoped memory for tpu_custom_call.1']
    #allocation11 [shape = 'u8[32768]{0}', space=vmem, size = 0x8000, scoped, tag = 'input window, operand 4']
    #allocation12 [shape = 's32[2]{0}', space=sflag, size = 0x8, scoped, tag = 'scoped memory for tpu_custom_call.1']
    #allocation13 [shape = 'u8[8192]{0}', space=vmem, size = 0x2000, scoped, tag = 'input window, operand 5']
    #allocation14 [shape = 'u8[8192]{0}', space=vmem, size = 0x2000, scoped, tag = 'input window, operand 6']
    #allocation15 [shape = 's32[2]{0}', space=sflag, size = 0x8, scoped, tag = 'scoped memory for tpu_custom_call.1']
    #allocation16 [shape = 'u8[512]{0}', space=vmem, size = 0x400, scoped, tag = 'output window, operand 0, single buffered']
    #allocation17 [shape = 'u8[8192]{0}', space=vmem, size = 0x2000, scoped, tag = 'output window, operand 1']
    #allocation18 [shape = 's32[2]{0}', space=sflag, size = 0x8, scoped, tag = 'scoped memory for tpu_custom_call.1']
    %14 = vsyncpa [#allocation9], 0
    %s15 = scalar_lea.sflag [#allocation9], 1
    %16 = vsyncpa %s15, 0
    %17 = vsyncpa [#allocation12], 0
    %s18 = scalar_lea.sflag [#allocation12], 1
    %19 = vsyncpa %s18, 0
    %20 = vsyncpa [#allocation15], 0
    %s21 = scalar_lea.sflag [#allocation15], 1
    %22 = vsyncpa %s21, 0
    %23 = vsyncpa [#allocation10], 0
    %24 = vsyncpa [#allocation18], 0
    %s25 = scalar_lea.sflag [#allocation18], 1
    %26 = vsyncpa %s25, 0
    loop: start=0, step=1, limit=4
    $region2: #{tpu_custom_call.1} parent=1 // loop_pre_header
      _
    $region3: #{tpu_custom_call.1} parent=1 // loop_header
      %s28 = sphi 0, %s32
      %p29 = scmp.ge.s32.totalorder %s28, 4
      %s38 = sphi 0, %s40
      %s41 = sphi 0, %s38
      %s42 = sphi 0, %s41
      %s58 = sphi 0, %s42
      %s64 = sphi 0, %s66
      %s67 = sphi 0, %s64
      %s68 = sphi 0, %s67
      %s84 = sphi 0, %s68
      %s90 = sphi 0, %s92
      %s93 = sphi 0, %s90
      %s94 = sphi 0, %s93
      %s110 = sphi 0, %s94
      %s116 = sphi 0, %s118
      %s119 = sphi 0, %s116
      %s120 = sphi 0, %s119
      %s136 = sphi 0, %s120
      %s140 = sphi 0, %s140
      %s142 = sphi 0, %s140
      %s143 = sphi 0, %s142
      %s157 = sphi 0, %s143
      %s163 = sphi 0, %s165
      %s166 = sphi 0, %s163
      %s167 = sphi 0, %s166
      %s183 = sphi 0, %s167
    $region4: #{tpu_custom_call.1} parent=1 // loop_header_branch
      %31 = sbr.rel (%p29) target = $region8
    $region5: #{tpu_custom_call.1} parent=1 // loop_body
      %s33 = ssub.s32 %s28, 1
      %s34 = ssub.s32 %s28, 2
      %s35 = sadd.s32 %s28, 1
      %s36 = ssub.s32 %s28, %s35
      %p37 = scmp.eq.s32.totalorder %s36, 0
      %s39 = sadd.s32 %s38, 1
      %s40 = scalar_select %p37, %s38, %s39
      %p43 = pneg %p37
      %p44 = scmp.eq.s32.totalorder %s28, 1
      %p45 = por %p43, %p44
      %p46 = scmp.ne.s32.totalorder %s38, %s41
      %p47 = scmp.eq.s32.totalorder %s28, 0
      %p48 = por %p46, %p47
      %p49 = scmp.ne.s32.totalorder %s38, %s41
      %p50 = scmp.eq.s32.totalorder %s33, 1
      %p51 = por %p49, %p50
      %p52 = scmp.ne.s32.totalorder %s41, %s42
      %p53 = scmp.eq.s32.totalorder %s33, 0
      %p54 = por %p52, %p53
      %p55 = scmp.ne.s32.totalorder %s41, %s42
      %p56 = scmp.eq.s32.totalorder %s34, 1
      %p57 = por %p55, %p56
      %p59 = scmp.ne.s32.totalorder %s42, %s58
      %p60 = scmp.eq.s32.totalorder %s34, 0
      %p61 = por %p59, %p60
      %s62 = ssub.s32 %s28, %s35
      %p63 = scmp.eq.s32.totalorder %s62, 0
      %s65 = sadd.s32 %s64, 1
      %s66 = scalar_select %p63, %s64, %s65
      %p69 = pneg %p63
      %p70 = scmp.eq.s32.totalorder %s28, 1
      %p71 = por %p69, %p70
      %p72 = scmp.ne.s32.totalorder %s64, %s67
      %p73 = scmp.eq.s32.totalorder %s28, 0
      %p74 = por %p72, %p73
      %p75 = scmp.ne.s32.totalorder %s64, %s67
      %p76 = scmp.eq.s32.totalorder %s33, 1
      %p77 = por %p75, %p76
      %p78 = scmp.ne.s32.totalorder %s67, %s68
      %p79 = scmp.eq.s32.totalorder %s33, 0
      %p80 = por %p78, %p79
      %p81 = scmp.ne.s32.totalorder %s67, %s68
      %p82 = scmp.eq.s32.totalorder %s34, 1
      %p83 = por %p81, %p82
      %p85 = scmp.ne.s32.totalorder %s68, %s84
      %p86 = scmp.eq.s32.totalorder %s34, 0
      %p87 = por %p85, %p86
      %s88 = ssub.s32 %s28, %s35
      %p89 = scmp.eq.s32.totalorder %s88, 0
      %s91 = sadd.s32 %s90, 1
      %s92 = scalar_select %p89, %s90, %s91
      %p95 = pneg %p89
      %p96 = scmp.eq.s32.totalorder %s28, 1
      %p97 = por %p95, %p96
      %p98 = scmp.ne.s32.totalorder %s90, %s93
      %p99 = scmp.eq.s32.totalorder %s28, 0
      %p100 = por %p98, %p99
      %p101 = scmp.ne.s32.totalorder %s90, %s93
      %p102 = scmp.eq.s32.totalorder %s33, 1
      %p103 = por %p101, %p102
      %p104 = scmp.ne.s32.totalorder %s93, %s94
      %p105 = scmp.eq.s32.totalorder %s33, 0
      %p106 = por %p104, %p105
      %p107 = scmp.ne.s32.totalorder %s93, %s94
      %p108 = scmp.eq.s32.totalorder %s34, 1
      %p109 = por %p107, %p108
      %p111 = scmp.ne.s32.totalorder %s94, %s110
      %p112 = scmp.eq.s32.totalorder %s34, 0
      %p113 = por %p111, %p112
      %s114 = ssub.s32 %s28, %s35
      %p115 = scmp.eq.s32.totalorder %s114, 0
      %s117 = sadd.s32 %s116, 1
      %s118 = scalar_select %p115, %s116, %s117
      %p121 = pneg %p115
      %p122 = scmp.eq.s32.totalorder %s28, 1
      %p123 = por %p121, %p122
      %p124 = scmp.ne.s32.totalorder %s116, %s119
      %p125 = scmp.eq.s32.totalorder %s28, 0
      %p126 = por %p124, %p125
      %p127 = scmp.ne.s32.totalorder %s116, %s119
      %p128 = scmp.eq.s32.totalorder %s33, 1
      %p129 = por %p127, %p128
      %p130 = scmp.ne.s32.totalorder %s119, %s120
      %p131 = scmp.eq.s32.totalorder %s33, 0
      %p132 = por %p130, %p131
      %p133 = scmp.ne.s32.totalorder %s119, %s120
      %p134 = scmp.eq.s32.totalorder %s34, 1
      %p135 = por %p133, %p134
      %p137 = scmp.ne.s32.totalorder %s120, %s136
      %p138 = scmp.eq.s32.totalorder %s34, 0
      %p139 = por %p137, %p138
      %s141 = sadd.s32 %s140, 1
      %p144 = scmp.eq.s32.totalorder %s28, 1
      %p145 = scmp.ne.s32.totalorder %s140, %s142
      %p146 = scmp.eq.s32.totalorder %s28, 0
      %p147 = por %p145, %p146
      %p148 = scmp.ne.s32.totalorder %s140, %s142
      %p149 = scmp.eq.s32.totalorder %s33, 1
      %p150 = por %p148, %p149
      %p151 = scmp.ne.s32.totalorder %s142, %s143
      %p152 = scmp.eq.s32.totalorder %s33, 0
      %p153 = por %p151, %p152
      %p154 = scmp.ne.s32.totalorder %s142, %s143
      %p155 = scmp.eq.s32.totalorder %s34, 1
      %p156 = por %p154, %p155
      %p158 = scmp.ne.s32.totalorder %s143, %s157
      %p159 = scmp.eq.s32.totalorder %s34, 0
      %p160 = por %p158, %p159
      %s161 = ssub.s32 %s28, %s35
      %p162 = scmp.eq.s32.totalorder %s161, 0
      %s164 = sadd.s32 %s163, 1
      %s165 = scalar_select %p162, %s163, %s164
      %p168 = pneg %p162
      %p169 = scmp.eq.s32.totalorder %s28, 1
      %p170 = por %p168, %p169
      %p171 = scmp.ne.s32.totalorder %s163, %s166
      %p172 = scmp.eq.s32.totalorder %s28, 0
      %p173 = por %p171, %p172
      %p174 = scmp.ne.s32.totalorder %s163, %s166
      %p175 = scmp.eq.s32.totalorder %s33, 1
      %p176 = por %p174, %p175
      %p177 = scmp.ne.s32.totalorder %s166, %s167
      %p178 = scmp.eq.s32.totalorder %s33, 0
      %p179 = por %p177, %p178
      %p180 = scmp.ne.s32.totalorder %s166, %s167
      %p181 = scmp.eq.s32.totalorder %s34, 1
      %p182 = por %p180, %p181
      %p184 = scmp.ne.s32.totalorder %s167, %s183
      %p185 = scmp.eq.s32.totalorder %s34, 0
      %p186 = por %p184, %p185
      %p187 = scmp.le.s32.totalorder 1, %s28
      %p188 = scmp.lt.s32.totalorder %s28, 3
      %p189 = pnand %p187, %p188
      %p190 = pneg %p189
      // Predicated region
      $region9: #{tpu_custom_call.1} parent=5 // pred_check
        _
      $region10: #{tpu_custom_call.1} parent=5 // pred_check_branch
        %192 = sbr.rel (%p189) target = $region12
      $region11: #{tpu_custom_call.1} parent=5 // pred_region
        %s193 = ssub.s32 %s28, 1
      $region12: #{tpu_custom_call.1} parent=5 // pred_fallthru
        _
      %p194 = scmp.lt.s32.totalorder %s28, 2
      // Predicated region
      $region13: #{tpu_custom_call.1} parent=5 // pred_check
        %p195 = pneg %p194
      $region14: #{tpu_custom_call.1} parent=5 // pred_check_branch
        %197 = sbr.rel (%p195) target = $region16
      $region15: #{tpu_custom_call.1} parent=5 // pred_region
        // Predicated region
        $region17: #{tpu_custom_call.1} parent=15 // pred_check
          %p198 = pneg %p48
        $region18: #{tpu_custom_call.1} parent=15 // pred_check_branch
          %200 = sbr.rel (%p198) target = $region20
        $region19: #{tpu_custom_call.1} parent=15 // pred_region
          %s201 = sand.u32 %s38, 1
          %s202 = scalar_lea.sflag [#allocation9], %s201
          %s203 = sand.u32 %s38, 1
          %s204 = smul.addr %s203, 8
          %s205 = scalar_lea.vmem [#allocation8], %s204
          %s207 = ssub.s32 128, 128
          %208 = vsyncadd %s202, %s207
          %s209 = smul.addr %s28, 128
          %s210 = scalar_lea.hbm %s0, %s209
          %s212 = sshll.u32 %s205, 4
          %s213 = int_to_ptr.vmem [resolvable:$true] %s212
          %215 = dma.hbm_to_vmem [thread:$0]  %s210, 128, %s213, %s202
        $region20: #{tpu_custom_call.1} parent=15 // pred_fallthru
          _
        // Predicated region
        $region21: #{tpu_custom_call.1} parent=15 // pred_check
          %p216 = pneg %p74
        $region22: #{tpu_custom_call.1} parent=15 // pred_check_branch
          %218 = sbr.rel (%p216) target = $region24
        $region23: #{tpu_custom_call.1} parent=15 // pred_region
          %s219 = sand.u32 %s28, 1
          %s220 = scalar_lea.sflag [#allocation12], %s219
          %s221 = sand.u32 %s64, 1
          %s222 = smul.addr %s221, 32
          %s223 = scalar_lea.vmem [#allocation11], %s222
          %s225 = ssub.s32 512, 512
          %226 = vsyncadd %s220, %s225
          %s227 = smul.addr %s28, 4
          %s228 = smul.addr %s227, 128
          %s229 = scalar_lea.hbm %s4, %s228
          %s231 = sshll.u32 %s223, 4
          %s232 = int_to_ptr.vmem [resolvable:$true] %s231
          %234 = dma.hbm_to_vmem [thread:$0]  %s229, 512, %s232, %s220
        $region24: #{tpu_custom_call.1} parent=15 // pred_fallthru
          _
        // Predicated region
        $region25: #{tpu_custom_call.1} parent=15 // pred_check
          %p235 = pneg %p100
        $region26: #{tpu_custom_call.1} parent=15 // pred_check_branch
          %237 = sbr.rel (%p235) target = $region28
        $region27: #{tpu_custom_call.1} parent=15 // pred_region
          %s238 = sand.u32 %s28, 1
          %s239 = scalar_lea.sflag [#allocation12], %s238
          %s240 = sand.u32 %s90, 1
          %s241 = smul.addr %s240, 8
          %s242 = scalar_lea.vmem [#allocation13], %s241
          %s244 = ssub.s32 128, 128
          %245 = vsyncadd %s239, %s244
          %s246 = smul.addr %s28, 128
          %s247 = scalar_lea.hbm %s5, %s246
          %s249 = sshll.u32 %s242, 4
          %s250 = int_to_ptr.vmem [resolvable:$true] %s249
          %252 = dma.hbm_to_vmem [thread:$0]  %s247, 128, %s250, %s239
        $region28: #{tpu_custom_call.1} parent=15 // pred_fallthru
          _
        // Predicated region
        $region29: #{tpu_custom_call.1} parent=15 // pred_check
          %p253 = pneg %p126
        $region30: #{tpu_custom_call.1} parent=15 // pred_check_branch
          %255 = sbr.rel (%p253) target = $region32
        $region31: #{tpu_custom_call.1} parent=15 // pred_region
          %s256 = sand.u32 %s116, 1
          %s257 = scalar_lea.sflag [#allocation15], %s256
          %s258 = sand.u32 %s116, 1
          %s259 = smul.addr %s258, 8
          %s260 = scalar_lea.vmem [#allocation14], %s259
          %s262 = ssub.s32 128, 128
          %263 = vsyncadd %s257, %s262
          %s264 = smul.addr %s28, 128
          %s265 = scalar_lea.hbm %s6, %s264
          %s267 = sshll.u32 %s260, 4
          %s268 = int_to_ptr.vmem [resolvable:$true] %s267
          %270 = dma.hbm_to_vmem [thread:$0]  %s265, 128, %s268, %s257
        $region32: #{tpu_custom_call.1} parent=15 // pred_fallthru
          _
      $region16: #{tpu_custom_call.1} parent=5 // pred_fallthru
        _
      %p271 = scmp.le.s32.totalorder 1, %s28
      %p272 = scmp.lt.s32.totalorder %s28, 3
      %p273 = pnand %p271, %p272
      %p274 = pneg %p273
      // Predicated region
      $region33: #{tpu_custom_call.1} parent=5 // pred_check
        _
      $region34: #{tpu_custom_call.1} parent=5 // pred_check_branch
        %276 = sbr.rel (%p273) target = $region36
      $region35: #{tpu_custom_call.1} parent=5 // pred_region
        %s277 = ssub.s32 %s28, 1
        %s278 = sand.u32 %s41, 1
        %s279 = scalar_lea.sflag [#allocation9], %s278
        %s280 = sand.u32 %s41, 1
        %s281 = smul.addr %s280, 8
        %s282 = scalar_lea.vmem [#allocation8], %s281
        // Predicated region
        $region37: #{tpu_custom_call.1} parent=35 // pred_check
          %p283 = pneg %p54
        $region38: #{tpu_custom_call.1} parent=35 // pred_check_branch
          %285 = sbr.rel (%p283) target = $region40
        $region39: #{tpu_custom_call.1} parent=35 // pred_region
          %286 = dma.done %s279, 128
        $region40: #{tpu_custom_call.1} parent=35 // pred_fallthru
          _
        %s287 = sand.u32 %s33, 1
        %s288 = scalar_lea.sflag [#allocation12], %s287
        %s289 = sand.u32 %s67, 1
        %s290 = smul.addr %s289, 32
        %s291 = scalar_lea.vmem [#allocation11], %s290
        // Predicated region
        $region41: #{tpu_custom_call.1} parent=35 // pred_check
          %p292 = pneg %p80
        $region42: #{tpu_custom_call.1} parent=35 // pred_check_branch
          %294 = sbr.rel (%p292) target = $region44
        $region43: #{tpu_custom_call.1} parent=35 // pred_region
          %295 = dma.done %s288, 512
        $region44: #{tpu_custom_call.1} parent=35 // pred_fallthru
          _
        %s296 = sand.u32 %s33, 1
        %s297 = scalar_lea.sflag [#allocation12], %s296
        %s298 = sand.u32 %s93, 1
        %s299 = smul.addr %s298, 8
        %s300 = scalar_lea.vmem [#allocation13], %s299
        // Predicated region
        $region45: #{tpu_custom_call.1} parent=35 // pred_check
          %p301 = pneg %p106
        $region46: #{tpu_custom_call.1} parent=35 // pred_check_branch
          %303 = sbr.rel (%p301) target = $region48
        $region47: #{tpu_custom_call.1} parent=35 // pred_region
          %304 = dma.done %s297, 128
        $region48: #{tpu_custom_call.1} parent=35 // pred_fallthru
          _
        %s305 = sand.u32 %s119, 1
        %s306 = scalar_lea.sflag [#allocation15], %s305
        %s307 = sand.u32 %s119, 1
        %s308 = smul.addr %s307, 8
        %s309 = scalar_lea.vmem [#allocation14], %s308
        // Predicated region
        $region49: #{tpu_custom_call.1} parent=35 // pred_check
          %p310 = pneg %p132
        $region50: #{tpu_custom_call.1} parent=35 // pred_check_branch
          %312 = sbr.rel (%p310) target = $region52
        $region51: #{tpu_custom_call.1} parent=35 // pred_region
          %313 = dma.done %s306, 128
        $region52: #{tpu_custom_call.1} parent=35 // pred_fallthru
          _
        %s314 = sand.u32 %s41, 1
        %s315 = scalar_lea.sflag [#allocation9], %s314
        %s316 = sand.u32 %s41, 1
        %s317 = smul.addr %s316, 8
        %s318 = scalar_lea.vmem [#allocation8], %s317
        %p319 = pneg %p54
        %p320 = pneg %p51
        %s321 = sand.u32 %s33, 1
        %s322 = scalar_lea.sflag [#allocation12], %s321
        %s323 = sand.u32 %s67, 1
        %s324 = smul.addr %s323, 32
        %s325 = scalar_lea.vmem [#allocation11], %s324
        %p326 = pneg %p80
        %p327 = pneg %p77
        %s328 = sand.u32 %s33, 1
        %s329 = scalar_lea.sflag [#allocation12], %s328
        %s330 = sand.u32 %s93, 1
        %s331 = smul.addr %s330, 8
        %s332 = scalar_lea.vmem [#allocation13], %s331
        %p333 = pneg %p106
        %p334 = pneg %p103
        %s335 = sand.u32 %s119, 1
        %s336 = scalar_lea.sflag [#allocation15], %s335
        %s337 = sand.u32 %s119, 1
        %s338 = smul.addr %s337, 8
        %s339 = scalar_lea.vmem [#allocation14], %s338
        %p340 = pneg %p132
        %p341 = pneg %p129
        %p342 = pneg %p153
        %p343 = pneg %p150
        %p344 = pneg %p179
        %p345 = pneg %p176
        %s346 = sand.u32 %s166, 1
        %s347 = scalar_lea.sflag [#allocation18], %s346
        %s348 = sand.u32 %s166, 1
        %s349 = smul.addr %s348, 8
        %s350 = scalar_lea.vmem [#allocation17], %s349
        %p351 = scmp.eq.s32.totalorder %s33, 0
        // Predicated region
        $region53: #{tpu_custom_call.1} parent=35 // pred_check
          %p352 = pneg %p351
        $region54: #{tpu_custom_call.1} parent=35 // pred_check_branch
          %354 = sbr.rel (%p352) target = $region56
        $region55: #{tpu_custom_call.1} parent=35 // pred_region
          // Predicated region
          $region57: #{tpu_custom_call.1} parent=55 // pred_check
            _
          $region58: #{tpu_custom_call.1} parent=55 // pred_check_branch
            %356 = sbr.rel target = $region60
          $region59: #{tpu_custom_call.1} parent=55 // pred_region
            %357 = sst [smem:[#allocation21]] [#allocation20]
            %358 = sst [smem:[#allocation22]] [#allocation19]
          $region60: #{tpu_custom_call.1} parent=55 // pred_fallthru
            _
          %360 = shalt.err (0)
          %s362 = sshll.u32 [#allocation2], 4
          %s363 = int_to_ptr.vmem [resolvable:$true] %s362
          %365 = dma.hbm_to_vmem [thread:$0]  %s1, 256, %s363, [#allocation3]
          %s366 = scalar_lea.vmem [#allocation2], 16
          %s367 = scalar_lea.sflag [#allocation3], 1
          // Predicated region
          $region61: #{tpu_custom_call.1} parent=55 // pred_check
            _
          $region62: #{tpu_custom_call.1} parent=55 // pred_check_branch
            %369 = sbr.rel target = $region64
          $region63: #{tpu_custom_call.1} parent=55 // pred_region
            %370 = sst [smem:[#allocation21]] [#allocation24]
            %371 = sst [smem:[#allocation22]] [#allocation23]
          $region64: #{tpu_custom_call.1} parent=55 // pred_fallthru
            _
          %373 = shalt.err (0)
          %s375 = sshll.u32 %s366, 4
          %s376 = int_to_ptr.vmem [resolvable:$true] %s375
          %378 = dma.hbm_to_vmem [thread:$0]  %s2, 256, %s376, %s367
          %s379 = scalar_lea.vmem [#allocation2], 32
          %s380 = scalar_lea.sflag [#allocation3], 2
          // Predicated region
          $region65: #{tpu_custom_call.1} parent=55 // pred_check
            _
          $region66: #{tpu_custom_call.1} parent=55 // pred_check_branch
            %382 = sbr.rel target = $region68
          $region67: #{tpu_custom_call.1} parent=55 // pred_region
            %383 = sst [smem:[#allocation21]] [#allocation26]
            %384 = sst [smem:[#allocation22]] [#allocation25]
          $region68: #{tpu_custom_call.1} parent=55 // pred_fallthru
            _
          %386 = shalt.err (0)
          %s388 = sshll.u32 %s379, 4
          %s389 = int_to_ptr.vmem [resolvable:$true] %s388
          %391 = dma.hbm_to_vmem [thread:$0]  %s3, 128, %s389, %s380
          %392 = vst [vmem:[#allocation2 + $0x28] sm:$0xff] 0.0
          %393 = vst [vmem:[#allocation2 + $0x30] sm:$0xff] 0.0
          %394 = vst [vmem:[#allocation2 + $0x38] sm:$0xff] 0.0
          %395 = vst [vmem:[#allocation2 + $0x40] sm:$0xff] 0.0
          %396 = vst [vmem:[#allocation2 + $0x48] sm:$0xff] 0.0
          %397 = vst [vmem:[#allocation2 + $0x50] sm:$0xff] 0.0
          %398 = vst [vmem:[#allocation2 + $0x58] sm:$0xff] 0.0
          %399 = vst [vmem:[#allocation2 + $0x60] sm:$0xff] 0.0
          %400 = vst [vmem:[#allocation2 + $0x68] sm:$0xff] 0.0
          %401 = vst [vmem:[#allocation2 + $0x70] sm:$0xff] 0.0
          %402 = vst [vmem:[#allocation2 + $0x78] sm:$0xff] 0.0
          %vm403 = vcmask 0
          %404 = vst.msk [vmem:[#allocation4] sm:$0x1] %vm403, 0.0
          %405 = vst.msk [vmem:[#allocation5] sm:$0x1] %vm403, 0.0
          %406 = vst [vmem:[#allocation6] sm:$0x1] -inf
          %407 = vst [vmem:[#allocation7] sm:$0x1] 0.0
          %s408 = smul.u32 16, 1
          %s409 = sshll.u32 %s408, 4
          %410 = dma.done [#allocation3], %s409
          %s411 = sshll.u32 %s408, 4
          %412 = dma.done %s367, %s411
          %s413 = smul.u32 8, 1
          %s414 = sshll.u32 %s413, 4
          %415 = dma.done %s380, %s414
        $region56: #{tpu_custom_call.1} parent=35 // pred_fallthru
          _
        %v416 = vld [vmem:[%s282] sm:$0xff]
        %v417 = vld [vmem:[#allocation2] sm:$0xff]
        %v418 = vld [vmem:[#allocation2 + $0x8] sm:$0xff]
        %v419 = vld [vmem:[#allocation2 + $0x10] sm:$0xff]
        %v420 = vld [vmem:[#allocation2 + $0x18] sm:$0xff]
        %v421 = vld [vmem:[#allocation2 + $0x20] sm:$0xff]
        %v422 = vld [vmem:[#allocation2 + $0x28] sm:$0xff]
        %v423 = vld [vmem:[#allocation2 + $0x30] sm:$0xff]
        %v424 = vld [vmem:[#allocation2 + $0x38] sm:$0xff]
        %v425 = vld [vmem:[#allocation2 + $0x40] sm:$0xff]
        %v426 = vld [vmem:[#allocation2 + $0x48] sm:$0xff]
        %v427 = vld [vmem:[#allocation2 + $0x50] sm:$0xff]
        %v428 = vld [vmem:[#allocation2 + $0x58] sm:$0xff]
        %v429 = vld [vmem:[#allocation2 + $0x60] sm:$0xff]
        %v430 = vld [vmem:[#allocation2 + $0x68] sm:$0xff]
        %v431 = vld [vmem:[#allocation2 + $0x70] sm:$0xff]
        %v432 = vld [vmem:[#allocation2 + $0x78] sm:$0xff]
        %433 = vmatprep.subr.mxu0 0.0
        %434 = vmatpush1.xpose.msra.mxu0 %v417
        %435 = vmatprep.subr.mxu0 0.0
        %436 = vmatpush1.xpose.msra.mxu0 %v418
        %437 = vmatprep.subr.mxu0 0.0
        %438 = vmatpush1.xpose.msra.mxu0 %v419
        %439 = vmatprep.subr.mxu0 0.0
        %440 = vmatpush1.xpose.msra.mxu0 %v420
        %441 = vmatprep.subr.mxu0 0.0
        %442 = vmatpush1.xpose.msra.mxu0 %v421
        %443 = vmatprep.subr.mxu0 0.0
        %444 = vmatpush1.xpose.msra.mxu0 %v422
        %445 = vmatprep.subr.mxu0 0.0
        %446 = vmatpush1.xpose.msra.mxu0 %v423
        %447 = vmatprep.subr.mxu0 0.0
        %448 = vmatpush1.xpose.msra.mxu0 %v424
        %449 = vmatprep.subr.mxu0 0.0
        %450 = vmatpush1.xpose.msra.mxu0 %v425
        %451 = vmatprep.subr.mxu0 0.0
        %452 = vmatpush1.xpose.msra.mxu0 %v426
        %453 = vmatprep.subr.mxu0 0.0
        %454 = vmatpush1.xpose.msra.mxu0 %v427
        %455 = vmatprep.subr.mxu0 0.0
        %456 = vmatpush1.xpose.msra.mxu0 %v428
        %457 = vmatprep.subr.mxu0 0.0
        %458 = vmatpush1.xpose.msra.mxu0 %v429
        %459 = vmatprep.subr.mxu0 0.0
        %460 = vmatpush1.xpose.msra.mxu0 %v430
        %461 = vmatprep.subr.mxu0 0.0
        %462 = vmatpush1.xpose.msra.mxu0 %v431
        %463 = vmatprep.subr.mxu0 0.0
        %464 = vmatpush1.xpose.msra.mxu0 %v432
        %465 = vmatprep.subr.mxu0 0.0
        %466 = vmatpush1.xpose.msra.mxu0 0.0
        %467 = vmatprep.subr.mxu0 0.0
        %468 = vmatpush1.xpose.msra.mxu0 0.0
        %469 = vmatprep.subr.mxu0 0.0
        %470 = vmatpush1.xpose.msra.mxu0 0.0
        %471 = vmatprep.subr.mxu0 0.0
        %472 = vmatpush1.xpose.msra.mxu0 0.0
        %473 = vmatprep.subr.mxu0 0.0
        %474 = vmatpush1.xpose.msra.mxu0 0.0
        %475 = vmatprep.subr.mxu0 0.0
        %476 = vmatpush1.xpose.msra.mxu0 0.0
        %477 = vmatprep.subr.mxu0 0.0
        %478 = vmatpush1.xpose.msra.mxu0 0.0
        %479 = vmatprep.subr.mxu0 0.0
        %480 = vmatpush1.xpose.msra.mxu0 0.0
        %481 = vmatprep.subr.mxu0 0.0
        %482 = vmatpush1.xpose.msra.mxu0 0.0
        %483 = vmatprep.subr.mxu0 0.0
        %484 = vmatpush1.xpose.msra.mxu0 0.0
        %485 = vmatprep.subr.mxu0 0.0
        %486 = vmatpush1.xpose.msra.mxu0 0.0
        %487 = vmatprep.subr.mxu0 0.0
        %488 = vmatpush1.xpose.msra.mxu0 0.0
        %489 = vmatprep.subr.mxu0 0.0
        %490 = vmatpush1.xpose.msra.mxu0 0.0
        %491 = vmatprep.subr.mxu0 0.0
        %492 = vmatpush1.xpose.msra.mxu0 0.0
        %493 = vmatprep.subr.mxu0 0.0
        %494 = vmatpush1.xpose.msra.mxu0 0.0
        %495 = vmatprep.subr.mxu0 0.0
        %496 = vmatpush1.xpose.msra.mxu0 0.0
        %497 = vmatprep.mubr.f32.mxu0 0.0
        %498 = vmatmul.mubr.f32.gmra.mrb[0].mxu0 %v416
        %v499 = vpop.f32.mrb[0].mxu0
        %v500 = vadd.f32 0.0, %v499
        %v501 = vpop.f32.mrb[0].mxu0
        %502 = vdwg.mxu0
        %s503 = smul.u32 %s33, 8
        %v504 = vlaneseq
        %v505 = vshrl.u32 %v504, 7
        %v506 = vstv %s503
        %v507 = vadd.s32 %v506, %v505
        %v508 = vlaneseq
        %v509 = vand.u32 %v508, 127
        %vm510 = vcmp.eq.s32.totalorder %v507, %v509
        %v511 = vsel %vm510, 1, 0
        %v512 = vcvt.s32.f32 %v511
        %v513 = vsub.f32 %v500, %v512
        %v514 = vmul.f32 %v513, 1.442695
        %v515 = vpow.pop %v514
        %v516 = vld [vmem:[%s300] sm:$0xff]
        %v517 = vsel %vm510, %v515, 0.0
        %518 = vadd.xlane.f32.xlu0 %v517
        %v519 = vpop.xlane.xlu0 %518
        %v520 = vmul.f32 %v515, %v516
        %521 = vadd.xlane.f32.xlu0 %v520
        %v522 = vpop.xlane.xlu0 %521
        %v523 = vsub.f32 %v522, %v519
        %v524 = vld [vmem:[%s309] sm:$0xff]
        %v525 = vld [vmem:[%s291] sm:$0xff]
        %v526 = vmul.f32 %v416, %v525
        %527 = vadd.xlane.f32.xlu0 %v526
        %v528 = vpop.xlane.xlu0 %527
        %v529 = vmul.f32 %v528, 1.442695
        %v530 = vpow.pop %v529
        %v531 = vmul.f32 %v530, %v524
        %v532 = vadd.f32 %v531, 0.0
        %v533 = vld [vmem:[%s291 + $0x8] sm:$0xff]
        %v534 = vmul.f32 %v416, %v533
        %535 = vadd.xlane.f32.xlu0 %v534
        %v536 = vpop.xlane.xlu0 %535
        %v537 = vmul.f32 %v536, 1.442695
        %v538 = vpow.pop %v537
        %v539 = vmul.f32 %v538, %v524
        %541 = vrot.lane.b32.xlu0 %v539, 127
        %v542 = vpop.permute.xlu0 %541
        %v544 = vadd.f32 %v532, %v542
        %v545 = vld [vmem:[%s291 + $0x10] sm:$0xff]
        %v546 = vmul.f32 %v416, %v545
        %547 = vadd.xlane.f32.xlu0 %v546
        %v548 = vpop.xlane.xlu0 %547
        %v549 = vmul.f32 %v548, 1.442695
        %v550 = vpow.pop %v549
        %v551 = vmul.f32 %v550, %v524
        %553 = vrot.lane.b32.xlu0 %v551, 126
        %v554 = vpop.permute.xlu0 %553
        %v556 = vadd.f32 %v544, %v554
        %v557 = vld [vmem:[%s291 + $0x18] sm:$0xff]
        %v558 = vmul.f32 %v416, %v557
        %559 = vadd.xlane.f32.xlu0 %v558
        %v560 = vpop.xlane.xlu0 %559
        %v561 = vmul.f32 %v560, 1.442695
        %v562 = vpow.pop %v561
        %v563 = vmul.f32 %v562, %v524
        %565 = vrot.lane.b32.xlu0 %v563, 125
        %v566 = vpop.permute.xlu0 %565
        %v568 = vadd.f32 %v556, %v566
        %v569 = vmul.f32 %v568, 0.05
        %v570 = vsub.f32 %v523, %v569
        %v571 = vmax.f32 %v570, 0.0
        %v572 = vmul.f32 %v571, 134.73685
        %v573 = vadd.f32 %v519, %v572
        %v574 = vrcp.pop %v573
        %v575 = vmul.f32 %v519, %v574
        %v576 = vlog2.pop %v575
        %v577 = vmul.f32 %v576, 0.6931472
        %v578 = vld [vmem:[#allocation4] sm:$0x1]
        %vm579 = vcmask 7168
        %v580 = vsel %vm579, %v577, 0.0
        %v581 = vrot.slane %v580, 4
        %v582 = vadd.f32 %v580, %v581
        %v583 = vrot.slane %v582, 2
        %v584 = vadd.f32 %v582, %v583
        %v585 = vrot.slane %v584, 1
        %v586 = vadd.f32 %v584, %v585
        %v587 = vadd.f32 %v578, %v586
        %vm588 = vcmask 0
        %589 = vst.msk [vmem:[#allocation4] sm:$0x1] %vm588, %v587
        %v590 = vsel %vm510, %v513, 0.0
        %591 = vadd.xlane.f32.xlu0 %v590
        %v592 = vpop.xlane.xlu0 %591
        %v593 = vld [vmem:[#allocation5] sm:$0x1]
        %v594 = vrot.slane %v592, 4
        %v595 = vadd.f32 %v592, %v594
        %v596 = vrot.slane %v595, 2
        %v597 = vadd.f32 %v595, %v596
        %v598 = vrot.slane %v597, 1
        %v599 = vadd.f32 %v597, %v598
        %v600 = vadd.f32 %v593, %v599
        %601 = vst.msk [vmem:[#allocation5] sm:$0x1] %vm588, %v600
        %v602 = vld [vmem:[#allocation6] sm:$0x1]
        %v603 = vld [vmem:[#allocation7] sm:$0x1]
        %v604 = vrot.slane %v513, 4
        %v605 = vmax.f32 %v513, %v604
        %v606 = vrot.slane %v605, 2
        %v607 = vmax.f32 %v605, %v606
        %v608 = vrot.slane %v607, 1
        %v609 = vmax.f32 %v607, %v608
        %v610 = vmax.f32 %v602, %v609
        %v611 = vrot.slane %v515, 4
        %v612 = vadd.f32 %v515, %v611
        %v613 = vrot.slane %v612, 2
        %v614 = vadd.f32 %v612, %v613
        %v615 = vrot.slane %v614, 1
        %v616 = vadd.f32 %v614, %v615
        %v617 = vsub.f32 %v602, %v610
        %v618 = vmul.f32 %v617, 1.442695
        %v619 = vpow.pop %v618
        %v620 = vmul.f32 %v603, %v619
        %v621 = vsub.f32 0.0, %v610
        %v622 = vmul.f32 %v621, 1.442695
        %v623 = vpow.pop %v622
        %v624 = vmul.f32 %v616, %v623
        %v625 = vadd.f32 %v620, %v624
        %626 = vst [vmem:[#allocation7] sm:$0x1] %v625
        %627 = vst [vmem:[#allocation6] sm:$0x1] %v610
        %628 = vst [vmem:[%s350] sm:$0xff] %v513
        %p629 = scmp.eq.s32.totalorder %s33, 1
        // Predicated region
        $region69: #{tpu_custom_call.1} parent=35 // pred_check
          %p630 = pneg %p629
        $region70: #{tpu_custom_call.1} parent=35 // pred_check_branch
          %632 = sbr.rel (%p630) target = $region72
        $region71: #{tpu_custom_call.1} parent=35 // pred_region
          %v633 = vld [vmem:[#allocation4] sm:$0x1]
          %v634 = vsub.f32 0.0, %v633
          %v635 = vmul.f32 %v634, 0.0625
          %v636 = vld [vmem:[#allocation7] sm:$0x1]
          %v637 = vlog2.pop %v636
          %v638 = vmul.f32 %v637, 0.6931472
          %v639 = vld [vmem:[#allocation6] sm:$0x1]
          %v640 = vadd.f32 %v638, %v639
          %vm641 = vcmp.lt.s32.totalorder %v509, 16
          %v642 = vsel %vm641, %v640, 0.0
          %vm643 = vcmask 1040384
          %v644 = vsel %vm643, %v642, 0.0
          %645 = vadd.xlane.f32.xlu0 %v644
          %v646 = vpop.xlane.xlu0 %645
          %v647 = vld [vmem:[#allocation5] sm:$0x1]
          %v648 = vsub.f32 %v646, %v647
          %v649 = vmul.f32 %v648, 0.0625
          %v650 = vadd.f32 %v635, %v649
          %651 = vst.msk [vmem:[#allocation16] sm:$0x1] %vm588, %v650
        $region72: #{tpu_custom_call.1} parent=35 // pred_fallthru
          _
        %s652 = sand.u32 %s166, 1
        %s653 = scalar_lea.sflag [#allocation18], %s652
        %s654 = sand.u32 %s166, 1
        %s655 = smul.addr %s654, 8
        %s656 = scalar_lea.vmem [#allocation17], %s655
        // Predicated region
        $region73: #{tpu_custom_call.1} parent=35 // pred_check
          %p657 = pneg %p150
        $region74: #{tpu_custom_call.1} parent=35 // pred_check_branch
          %659 = sbr.rel (%p657) target = $region76
        $region75: #{tpu_custom_call.1} parent=35 // pred_region
          %s661 = ssub.s32 16, 16
          %662 = vsyncadd [#allocation10], %s661
          %s664 = sshll.u32 [#allocation16], 4
          %s665 = int_to_ptr.vmem [resolvable:$true] %s664
          %667 = dma.vmem_to_hbm [thread:$0]  %s665, 16, %s7, [#allocation10]
        $region76: #{tpu_custom_call.1} parent=35 // pred_fallthru
          _
        // Predicated region
        $region77: #{tpu_custom_call.1} parent=35 // pred_check
          %p668 = pneg %p176
        $region78: #{tpu_custom_call.1} parent=35 // pred_check_branch
          %670 = sbr.rel (%p668) target = $region80
        $region79: #{tpu_custom_call.1} parent=35 // pred_region
          %s672 = ssub.s32 128, 128
          %673 = vsyncadd %s653, %s672
          %s674 = smul.addr %s33, 128
          %s675 = scalar_lea.hbm %s8, %s674
          %s677 = sshll.u32 %s656, 4
          %s678 = int_to_ptr.vmem [resolvable:$true] %s677
          %680 = dma.vmem_to_hbm [thread:$0]  %s678, 128, %s675, %s653
        $region80: #{tpu_custom_call.1} parent=35 // pred_fallthru
          _
        // Predicated region
        $region81: #{tpu_custom_call.1} parent=35 // pred_check
          %p681 = pneg %p150
        $region82: #{tpu_custom_call.1} parent=35 // pred_check_branch
          %683 = sbr.rel (%p681) target = $region84
        $region83: #{tpu_custom_call.1} parent=35 // pred_region
          %684 = dma.done [#allocation10], 16
        $region84: #{tpu_custom_call.1} parent=35 // pred_fallthru
          _
      $region36: #{tpu_custom_call.1} parent=5 // pred_fallthru
        _
      %p685 = scmp.le.s32.totalorder 2, %s28
      // Predicated region
      $region85: #{tpu_custom_call.1} parent=5 // pred_check
        %p686 = pneg %p685
      $region86: #{tpu_custom_call.1} parent=5 // pred_check_branch
        %688 = sbr.rel (%p686) target = $region88
      $region87: #{tpu_custom_call.1} parent=5 // pred_region
        %s689 = ssub.s32 %s28, 2
        // Predicated region
        $region89: #{tpu_custom_call.1} parent=87 // pred_check
          %p690 = pneg %p182
        $region90: #{tpu_custom_call.1} parent=87 // pred_check_branch
          %692 = sbr.rel (%p690) target = $region92
        $region91: #{tpu_custom_call.1} parent=87 // pred_region
          %s693 = sand.u32 %s167, 1
          %s694 = scalar_lea.sflag [#allocation18], %s693
          %s695 = sand.u32 %s167, 1
          %s696 = smul.addr %s695, 8
          %s697 = scalar_lea.vmem [#allocation17], %s696
          %698 = dma.done %s694, 128
        $region92: #{tpu_custom_call.1} parent=87 // pred_fallthru
          _
      $region88: #{tpu_custom_call.1} parent=5 // pred_fallthru
        _
    $region6: #{tpu_custom_call.1} parent=1 // loop_footer
      %s32 = sadd.s32 1, %s28
    $region7: #{tpu_custom_call.1} parent=1 // loop_footer_branch
      %27 = sbr.rel target = $region3
    $region8: #{tpu_custom_call.1} parent=1 // loop_exit
      _
    %699 = vsyncpa [#allocation9], 1
    %s700 = scalar_lea.sflag [#allocation9], 1
    %701 = vsyncpa %s700, 1
    %702 = vsyncpa [#allocation12], 1
    %s703 = scalar_lea.sflag [#allocation12], 1
    %704 = vsyncpa %s703, 1
    %705 = vsyncpa [#allocation15], 1
    %s706 = scalar_lea.sflag [#allocation15], 1
    %707 = vsyncpa %s706, 1
    %708 = vsyncpa [#allocation10], 1
    %s709 = scalar_lea.sflag [#allocation10], 1
    %710 = vsyncpa %s709, 1
    %711 = vsyncpa [#allocation18], 1
    %s712 = scalar_lea.sflag [#allocation18], 1
    %713 = vsyncpa %s712, 1
  %714 = vsyncmov [#allocation3]
  %s715 = vpop.sfrf %714
  %p716 = scmp.eq.s32.totalorder %s715, 0
  %p717 = pneg %p716
  %719 = shalt.err (%p717)
  %s720 = scalar_lea.sflag [#allocation3], 1
  %721 = vsyncmov %s720
  %s722 = vpop.sfrf %721
  %p723 = scmp.eq.s32.totalorder %s722, 0
  %p724 = pneg %p723
  %726 = shalt.err (%p724)
  %s727 = scalar_lea.sflag [#allocation3], 2
  %728 = vsyncmov %s727
  %s729 = vpop.sfrf %728
  %p730 = scmp.eq.s32.totalorder %s729, 0
  %p731 = pneg %p730
  %733 = shalt.err (%p731)

</llo_original>
